<compile_context>
chip_gen: v5e
topology: v5e:2x2
jax: 0.10.0
libtpu: 0.0.40
codegen_flags: <defaults>
</compile_context>

<pallas_src>
import functools
import math

import jax
import jax.numpy as jnp
from jax.experimental import pallas as pl
from jax.experimental.pallas import tpu as pltpu

_LANE = 128


def _latency_fc_kernel(x_ref, w_ref, b_ref, o_ref, *, k):
    # x_ref: [TM, k]        k packed rows per output row (k=1 if out_dim % 128 == 0)
    # w_ref: [k, width]     block-diagonal weight, width = k * out_dim
    # b_ref: [1, width]     bias tiled k times
    # o_ref: [TM, width]
    x = x_ref[...].astype(jnp.float32)
    w = w_ref[...].astype(jnp.float32)
    b = b_ref[...].astype(jnp.float32)
    # VPU broadcast FMA; k is tiny (<= 8), unrolled statically.  Store-bound, so the
    # extra multiplies against block-diagonal zeros ride in VALU slack.
    acc = x[:, 0:1] * w[0:1, :] + b
    for j in range(1, k):
        acc = acc + x[:, j:j + 1] * w[j:j + 1, :]
    o_ref[...] = acc.astype(o_ref.dtype)


def _choose_tile_rows(mp, width, out_bytes):
    # Per-row VMEM footprint (double-buffered): x row pads to a full 128-lane f32
    # sublane; output row pads its last dim up to a multiple of 128 lanes.
    width_padded = ((width + _LANE - 1) // _LANE) * _LANE
    budget = 16 * 1024 * 1024  # conservative across v5e/v6e/v7x default scoped VMEM
    per_row = 2 * (_LANE * 4 + width_padded * out_bytes)
    tm = min(budget // per_row, 2048)
    tm = max(8, (int(tm) // 8) * 8)
    if mp <= tm:
        return mp  # single block; block shape == full array dims is always legal
    return tm


def _pick_pack_factor(m, out_dim):
    """Rows packed per output row so that width = k*out_dim is a multiple of 128."""
    if out_dim % _LANE == 0:
        return 1
    k = math.lcm(out_dim, _LANE) // out_dim
    if k <= 8 and m % k == 0:
        return k
    return 1  # fallback: correct, but last-dim < 128 stores are masked


def latency_encoder_forward(x, weight, bias, *, out_dtype=None, use_pallas=None,
                            min_pallas_elements=1 << 14):
    """x: [bs, seq_len, 1]; weight: [1, out_dim]; bias: [out_dim]."""
    bs, seq_len, in_dim = x.shape
    assert in_dim == 1, "LatencyEncoder.fc is nn.Linear(1, out_dim)"
    out_dim = weight.shape[1]
    out_dtype = x.dtype if out_dtype is None else out_dtype

    # TODO(synk): the B-is-not-None Fourier-feature branch (sin/cos concat) is dead
    # code for this module's forward (self.B is always None); not implemented.

    m = bs * seq_len

    if use_pallas is None:
        use_pallas = m * out_dim >= min_pallas_elements
    if not use_pallas:
        # Tiny problem: fixed Pallas launch/step overhead dwarfs the work; let XLA fuse.
        y = (x.reshape(m, 1).astype(jnp.float32) * weight.astype(jnp.float32)
             + bias.astype(jnp.float32)[None, :])
        return y.astype(out_dtype).reshape(bs, seq_len, out_dim)

    # Lane-dense output packing: k consecutive rows share one output row of width
    # k * out_dim (a multiple of 128 -> unmasked stores).
    k = _pick_pack_factor(m, out_dim)
    mp = m // k
    width = k * out_dim
    x_packed = x.reshape(mp, k)

    w32 = weight.astype(jnp.float32).reshape(1, out_dim)
    b32 = bias.astype(jnp.float32).reshape(1, out_dim)
    if k == 1:
        w_bd = w32
        b_tiled = b32
    else:
        # Block-diagonal weight: w_bd[j, j*out_dim:(j+1)*out_dim] = weight, else 0.
        eye = jnp.eye(k, dtype=jnp.float32)
        w_bd = (eye[:, :, None] * w32[0][None, None, :]).reshape(k, width)
        b_tiled = jnp.tile(b32, (1, k))

    out_bytes = jnp.dtype(out_dtype).itemsize
    tm = _choose_tile_rows(mp, width, out_bytes)
    grid = (pl.cdiv(mp, tm),)

    kernel = functools.partial(_latency_fc_kernel, k=k)
    out = pl.pallas_call(
        kernel,
        out_shape=jax.ShapeDtypeStruct((mp, width), out_dtype),
        grid=grid,
        in_specs=[
            pl.BlockSpec((tm, k), lambda i: (i, 0)),
            pl.BlockSpec((k, width), lambda i: (0, 0)),
            pl.BlockSpec((1, width), lambda i: (0, 0)),
        ],
        out_specs=pl.BlockSpec((tm, width), lambda i: (i, 0)),
        compiler_params=pltpu.CompilerParams(
            dimension_semantics=("parallel",),  # shards rows across v7x's 2 TCs
        ),
    )(x_packed, w_bd, b_tiled)

    # Row-major reshape undoes the lane packing exactly: [mp, k*out_dim] -> [m, out_dim].
    return out.reshape(bs, seq_len, out_dim)


if __name__ == "__main__":
    key = jax.random.PRNGKey(0)
    k_x, k_w, k_b, k_x2 = jax.random.split(key, 4)

    bs, seq_len, in_dim, out_dim = 2, 8, 1, 64

    # Deterministic params, mimicking nn.Linear(1, out_dim) init: U(-1, 1).
    weight = jax.random.uniform(k_w, (in_dim, out_dim), jnp.float32, -1.0, 1.0)
    bias = jax.random.uniform(k_b, (out_dim,), jnp.float32, -1.0, 1.0)
    x = jax.random.uniform(k_x, (bs, seq_len, in_dim), jnp.float32)

    # Small shape, forced through the Pallas path (packed k=2, single block).
    out = jax.block_until_ready(latency_encoder_forward(x, weight, bias, use_pallas=True))
    ref = (x.reshape(-1, in_dim) @ weight + bias[None, :]).reshape(bs, seq_len, out_dim)
    assert out.shape == (bs, seq_len, out_dim)
    assert jnp.allclose(out, ref, atol=1e-5, rtol=1e-5)

    # Larger shape exercising the tiled, pipelined multi-block path.
    bs2, seq2 = 2, 4096
    x2 = jax.random.uniform(k_x2, (bs2, seq2, in_dim), jnp.float32)
    out2 = jax.block_until_ready(latency_encoder_forward(x2, weight, bias, use_pallas=True))
    ref2 = (x2.reshape(-1, in_dim) @ weight + bias[None, :]).reshape(bs2, seq2, out_dim)
    assert jnp.allclose(out2, ref2, atol=1e-5, rtol=1e-5)

    # Default dispatch: tiny problem bypasses Pallas and uses the fused XLA path.
    out3 = jax.block_until_ready(latency_encoder_forward(x, weight, bias))
    assert jnp.allclose(out3, ref, atol=1e-5, rtol=1e-5)

    print("KERNEL_OK")
</pallas_src>

<mosaic_0001>
module attributes {stable_mosaic.version = 11 : i64} {
  func.func @_latency_fc_kernel(%arg0: i32, %arg1: memref<8x2xf32, #tpu.memory_space<vmem>>, %arg2: memref<2x128xf32, #tpu.memory_space<vmem>>, %arg3: memref<1x128xf32, #tpu.memory_space<vmem>>, %arg4: memref<8x128xf32, #tpu.memory_space<vmem>>) attributes {dimension_semantics = [#tpu.dimension_semantics<parallel>], iteration_bounds = array<i64: 1>, scalar_prefetch = 0 : i64, scratch_operands = 0 : i64, tpu.core_type = #tpu.core_type<tc>, window_params = [{transform_indices = @transform_0, window_bounds = array<i64: 8, 2>}, {pipeline_mode = #tpu.pipeline_mode<synchronous>, transform_indices = @transform_1, window_bounds = array<i64: 2, 128>}, {pipeline_mode = #tpu.pipeline_mode<synchronous>, transform_indices = @transform_2, window_bounds = array<i64: 1, 128>}, {transform_indices = @transform_3, window_bounds = array<i64: 8, 128>}]} {
    %c0 = arith.constant 0 : index
    %c0_0 = arith.constant 0 : index
    %0 = vector.load %arg1[%c0, %c0_0] : memref<8x2xf32, #tpu.memory_space<vmem>>, vector<8x2xf32>
    %c0_1 = arith.constant 0 : index
    %c0_2 = arith.constant 0 : index
    %1 = vector.load %arg2[%c0_1, %c0_2] : memref<2x128xf32, #tpu.memory_space<vmem>>, vector<2x128xf32>
    %c0_3 = arith.constant 0 : index
    %c0_4 = arith.constant 0 : index
    %2 = vector.load %arg3[%c0_3, %c0_4] : memref<1x128xf32, #tpu.memory_space<vmem>>, vector<1x128xf32>
    %3 = vector.extract_strided_slice %0 {offsets = [0, 0], sizes = [8, 1], strides = [1, 1]} : vector<8x2xf32> to vector<8x1xf32>
    %4 = vector.extract_strided_slice %1 {offsets = [0, 0], sizes = [1, 128], strides = [1, 1]} : vector<2x128xf32> to vector<1x128xf32>
    %5 = vector.broadcast %3 : vector<8x1xf32> to vector<8x128xf32>
    %6 = vector.broadcast %4 : vector<1x128xf32> to vector<8x128xf32>
    %7 = arith.mulf %5, %6 : vector<8x128xf32>
    %8 = vector.broadcast %2 : vector<1x128xf32> to vector<8x128xf32>
    %9 = arith.addf %7, %8 : vector<8x128xf32>
    %10 = vector.extract_strided_slice %0 {offsets = [0, 1], sizes = [8, 1], strides = [1, 1]} : vector<8x2xf32> to vector<8x1xf32>
    %11 = vector.extract_strided_slice %1 {offsets = [1, 0], sizes = [1, 128], strides = [1, 1]} : vector<2x128xf32> to vector<1x128xf32>
    %12 = vector.broadcast %10 : vector<8x1xf32> to vector<8x128xf32>
    %13 = vector.broadcast %11 : vector<1x128xf32> to vector<8x128xf32>
    %14 = arith.mulf %12, %13 : vector<8x128xf32>
    %15 = arith.addf %9, %14 : vector<8x128xf32>
    %c0_5 = arith.constant 0 : index
    %c0_6 = arith.constant 0 : index
    %16 = vector.load %arg4[%c0_5, %c0_6] : memref<8x128xf32, #tpu.memory_space<vmem>>, vector<8x128xf32>
    tpu.vector_store %arg4[%c0_5, %c0_6], %15 {strides = array<i32>} : memref<8x128xf32, #tpu.memory_space<vmem>>, vector<8x128xf32>,
    return
  }
  func.func @transform_0(%arg0: i32) -> (i32, i32) {
    %c0_i32 = arith.constant 0 : i32
    %c0_i32_0 = arith.constant 0 : i32
    return %arg0, %c0_i32 : i32, i32
  }
  func.func @transform_1(%arg0: i32) -> (i32, i32) {
    %c0_i32 = arith.constant 0 : i32
    %c0_i32_0 = arith.constant 0 : i32
    %c0_i32_1 = arith.constant 0 : i32
    return %c0_i32, %c0_i32_0 : i32, i32
  }
  func.func @transform_2(%arg0: i32) -> (i32, i32) {
    %c0_i32 = arith.constant 0 : i32
    %c0_i32_0 = arith.constant 0 : i32
    %c0_i32_1 = arith.constant 0 : i32
    return %c0_i32, %c0_i32_0 : i32, i32
  }
  func.func @transform_3(%arg0: i32) -> (i32, i32) {
    %c0_i32 = arith.constant 0 : i32
    %c0_i32_0 = arith.constant 0 : i32
    return %arg0, %c0_i32 : i32, i32
  }
}

</mosaic_0001>

<llo_original>
// kernel: tpu_custom_call.1
$region0: #{tpu_custom_call.1}
  #allocation0 [shape = 'u32[]', space=smem, size = 0x4, offset = 0x4, fixed_abs, tag = 'smem constant byte address 0x4 - core index']
  #allocation1 [shape = 'u32[72,128]{1,0:T(1,128)}', space=vmem, size = 0x9000, scoped, tag = 'internal scratch']
  %s0 = inlined_call_operand.vmem [shape: f32[8,2], index: 0, kind: input, shape index: {}]
  %s1 = inlined_call_operand.vmem [shape: f32[2,128], index: 1, kind: input, shape index: {}]
  %s2 = inlined_call_operand.vmem [shape: f32[1,128], index: 2, kind: input, shape index: {}]
  %s3 = inlined_call_operand.hbm [shape: f32[8,128], index: 3, kind: output, shape index: {}]
  %s4 = sld [smem:[#allocation0]]
  $region22: #{tpu_custom_call.1} parent=0
    _
  %s6 = ssub.s32 1, %s4
  %s7 = scalar_select 0, %s6, %s4
  $region1: #{tpu_custom_call.1} parent=0
    #allocation2 [shape = 'u8[4096]{0}', space=vmem, size = 0x1000, scoped, tag = 'output window, operand 0, single buffered']
    #allocation3 [shape = 's32[1]{0}', space=sflag, size = 0x4, scoped, tag = 'scoped memory for tpu_custom_call.1']
    %8 = vsyncpa [#allocation3], 0
    // Predicated region
    $region2: #{tpu_custom_call.1} parent=1 // pred_check
      _
    $region3: #{tpu_custom_call.1} parent=1 // pred_check_branch
      %10 = sbr.rel (0) target = $region5
    $region4: #{tpu_custom_call.1} parent=1 // pred_region
      _
    $region5: #{tpu_custom_call.1} parent=1 // pred_fallthru
      _
    // Predicated region
    $region6: #{tpu_custom_call.1} parent=1 // pred_check
      _
    $region7: #{tpu_custom_call.1} parent=1 // pred_check_branch
      %12 = sbr.rel (0) target = $region9
    $region8: #{tpu_custom_call.1} parent=1 // pred_region
      _
    $region9: #{tpu_custom_call.1} parent=1 // pred_fallthru
      _
    // Predicated region
    $region10: #{tpu_custom_call.1} parent=1 // pred_check
      _
    $region11: #{tpu_custom_call.1} parent=1 // pred_check_branch
      %14 = sbr.rel (0) target = $region13
    $region12: #{tpu_custom_call.1} parent=1 // pred_region
      _
    $region13: #{tpu_custom_call.1} parent=1 // pred_fallthru
      _
    %v15 = vld [vmem:[%s0] sm:$0xff]
    %v16 = vld [vmem:[%s1] sm:$0x3]
    %v17 = vld [vmem:[%s2] sm:$0x1]
    %19 = vset.pattern.permute.xlu0 0
    %20 = vperm.xlu0 %19, %v15
    %v21 = vpop.permute.xlu0 %20
    %v23 = vperm.slane %v16, 0
    %v24 = vmul.f32 %v21, %v23
    %v26 = vperm.slane %v17, 0
    %v28 = vadd.f32 %v24, %v26
    %29 = vset.pattern.permute.xlu0 1
    %30 = vperm.xlu0 %29, %v15
    %v31 = vpop.permute.xlu0 %30
    %v33 = vperm.slane %v16, 1
    %v34 = vmul.f32 %v31, %v33
    %v35 = vadd.f32 %v28, %v34
    %36 = vst [vmem:[#allocation2] sm:$0xff] %v35
    // Predicated region
    $region14: #{tpu_custom_call.1} parent=1 // pred_check
      _
    $region15: #{tpu_custom_call.1} parent=1 // pred_check_branch
      %38 = sbr.rel (0) target = $region17
    $region16: #{tpu_custom_call.1} parent=1 // pred_region
      %40 = vsyncadd [#allocation3], 0
      %s42 = sshll.u32 [#allocation2], 4
      %s43 = int_to_ptr.vmem [resolvable:$true] %s42
      %s44 = sshll.u32 %s3, 4
      %s45 = int_to_ptr.hbm [resolvable:$true] %s44
      %47 = dma.vmem_to_hbm [thread:$0]  %s43, 128, %s45, [#allocation3]
    $region17: #{tpu_custom_call.1} parent=1 // pred_fallthru
      _
    // Predicated region
    $region18: #{tpu_custom_call.1} parent=1 // pred_check
      _
    $region19: #{tpu_custom_call.1} parent=1 // pred_check_branch
      %49 = sbr.rel (0) target = $region21
    $region20: #{tpu_custom_call.1} parent=1 // pred_region
      %51 = dma.done [#allocation3], 128
    $region21: #{tpu_custom_call.1} parent=1 // pred_fallthru
      _
    %52 = vsyncpa [#allocation3], 1

</llo_original>
